<compile_context>
chip_gen: v6e
topology: v6e:2x2x1
jax: 0.10.0
libtpu: 0.0.40
codegen_flags: <defaults>
</compile_context>

<pallas_src>
import math

import jax
import jax.numpy as jnp
from jax import lax
from jax.experimental import pallas as pl
from jax.experimental.pallas import tpu as pltpu


def _round_up(x, m):
    return ((x + m - 1) // m) * m


# ---------------------------------------------------------------------------
# Pass 1: fused Q/K/V projections (computed once; hoisted out of the kv loop).
# ---------------------------------------------------------------------------
def _qkv_proj_kernel(q_ref, k_ref, v_ref, w_ref, qo_ref, ko_ref, vo_ref):
    q = q_ref[0].astype(jnp.bfloat16)
    k = k_ref[0].astype(jnp.bfloat16)
    v = v_ref[0].astype(jnp.bfloat16)
    qo_ref[0] = jnp.dot(q, w_ref[0],
                        preferred_element_type=jnp.float32).astype(qo_ref.dtype)
    ko_ref[0] = jnp.dot(k, w_ref[1],
                        preferred_element_type=jnp.float32).astype(ko_ref.dtype)
    vo_ref[0] = jnp.dot(v, w_ref[2],
                        preferred_element_type=jnp.float32).astype(vo_ref.dtype)


# ---------------------------------------------------------------------------
# Pass 2: flash-style online-softmax attention + fused output projection.
# ---------------------------------------------------------------------------
def _make_attn_kernel(n_heads, dqk_p, scale, seq_len, tile_k, needs_kv_mask):
    def kernel(qp_ref, kp_ref, vp_ref, wp_ref, b_ref, o_ref,
               m_scr, l_scr, acc_scr):
        ki = pl.program_id(2)

        @pl.when(ki == 0)
        def _init():
            m_scr[...] = jnp.full_like(m_scr, -jnp.inf)
            l_scr[...] = jnp.zeros_like(l_scr)
            acc_scr[...] = jnp.zeros_like(acc_scr)

        q = qp_ref[0]       # (tq, hd_p) bf16, pre-projected
        k = kp_ref[0]       # (tk, hd_p) bf16, pre-projected
        v = vp_ref[0]       # (tk, hd_p) bf16, pre-projected

        if needs_kv_mask:
            # Additive bias masking the zero-padded kv tail (static seq_len).
            col = ki * tile_k + lax.broadcasted_iota(jnp.int32, (1, tile_k), 1)
            kv_bias = jnp.where(col < seq_len, 0.0, -1e30).astype(jnp.float32)

        # Per-head online softmax; heads packed along lanes in 128-aligned
        # chunks so every slice below is lane-dense.
        for h in range(n_heads):
            sl = slice(h * dqk_p, (h + 1) * dqk_p)
            # Contract the minor dims directly (no explicit transpose).
            s = lax.dot_general(q[:, sl], k[:, sl],
                                (((1,), (1,)), ((), ())),
                                preferred_element_type=jnp.float32) * scale
            if needs_kv_mask:
                s = s + kv_bias
            # TODO(synk): mask is always None in the reference call path; a
            # user-provided additive mask would be applied to `s` here.
            m_prev = m_scr[h]
            m_new = jnp.maximum(m_prev, jnp.max(s, axis=-1, keepdims=True))
            alpha = jnp.exp(m_prev - m_new)
            p = jnp.exp(s - m_new)
            l_scr[h] = alpha * l_scr[h] + jnp.sum(p, axis=-1, keepdims=True)
            acc_scr[:, sl] = alpha * acc_scr[:, sl] + jnp.dot(
                p.astype(v.dtype), v[:, sl],
                preferred_element_type=jnp.float32)
            m_scr[h] = m_new

        @pl.when(ki == pl.num_programs(2) - 1)
        def _finalize():
            # Per-head 1/l scaling, then ONE (tq, hd_p) x (hd_p, d_out) matmul
            # (concat-then-Linear == packed-slab @ W_proj^T).
            for h in range(n_heads):
                sl = slice(h * dqk_p, (h + 1) * dqk_p)
                acc_scr[:, sl] = acc_scr[:, sl] * pl.reciprocal(
                    l_scr[h], approx=True)
            proj = jnp.dot(acc_scr[...], wp_ref[...],
                           preferred_element_type=jnp.float32)
            o_ref[0] = (proj + b_ref[...]).astype(o_ref.dtype)

    return kernel


def attention_selector(query, key, value, params, mask=None, return_att=True):
    # TODO(synk): mask is always None in the reference call path; masking of a
    # user-provided mask is not wired into the kernel.
    del mask
    wq, wk, wv, w_proj, b_proj = params
    B, S, dim_in = query.shape
    n_heads, _, dim_qk = wq.shape

    # ---- static layout / padding decisions --------------------------------
    d_in_p = _round_up(dim_in, 128)     # lane-dense contraction dim
    dqk_p = _round_up(dim_qk, 128)      # lane-aligned per-head chunk
    hd_p = n_heads * dqk_p              # packed head dim (multiple of 128)
    d_out = _round_up(dim_in, 128)      # lane-dense output store

    t = min(256, _round_up(S, 8))       # tile for q, kv and projection pass
    s_pad = _round_up(S, t)
    needs_kv_mask = (s_pad != S)
    n_s = s_pad // t

    cdt = jnp.bfloat16                  # MXU-native compute dtype
    f32 = jnp.float32

    # ---- weight packing (zero-padded, math unchanged) ----------------------
    def fuse(w):  # (H, dim_in, dim_qk) -> (d_in_p, hd_p)
        w = jnp.pad(w, ((0, 0), (0, d_in_p - dim_in), (0, dqk_p - dim_qk)))
        return jnp.transpose(w, (1, 0, 2)).reshape(d_in_p, hd_p)

    wqkv = jnp.stack([fuse(wq), fuse(wk), fuse(wv)]).astype(cdt)  # (3,dinp,hdp)

    # nn.Linear: out = cat @ W^T + b   (W: (dim_in, n_heads*dim_qk)).
    wpT = jnp.transpose(w_proj).reshape(n_heads, dim_qk, dim_in)
    wpT = jnp.pad(wpT, ((0, 0), (0, dqk_p - dim_qk), (0, d_out - dim_in)))
    wpT = wpT.reshape(hd_p, d_out).astype(f32)
    bias = jnp.pad(b_proj, (0, d_out - dim_in)).reshape(1, d_out).astype(f32)

    # ---- input padding ------------------------------------------------------
    def pad_x(x):
        return jnp.pad(x, ((0, 0), (0, s_pad - S), (0, d_in_p - dim_in)))

    qx, kx, vx = pad_x(query), pad_x(key), pad_x(value)

    # ---- pass 1: fused projections (done once, NOT per q-tile) -------------
    proj_shape = jax.ShapeDtypeStruct((B, s_pad, hd_p), cdt)
    qp, kp, vp = pl.pallas_call(
        _qkv_proj_kernel,
        out_shape=(proj_shape, proj_shape, proj_shape),
        grid_spec=pltpu.PrefetchScalarGridSpec(
            num_scalar_prefetch=0,
            grid=(B, n_s),
            in_specs=[
                pl.BlockSpec((1, t, d_in_p), lambda b, si: (b, si, 0)),
                pl.BlockSpec((1, t, d_in_p), lambda b, si: (b, si, 0)),
                pl.BlockSpec((1, t, d_in_p), lambda b, si: (b, si, 0)),
                # Constant block index -> fetched once, VMEM-resident.
                pl.BlockSpec((3, d_in_p, hd_p), lambda b, si: (0, 0, 0)),
            ],
            out_specs=[
                pl.BlockSpec((1, t, hd_p), lambda b, si: (b, si, 0)),
                pl.BlockSpec((1, t, hd_p), lambda b, si: (b, si, 0)),
                pl.BlockSpec((1, t, hd_p), lambda b, si: (b, si, 0)),
            ],
        ),
        compiler_params=pltpu.CompilerParams(
            dimension_semantics=("parallel", "parallel")),
    )(qx, kx, vx, wqkv)

    # ---- pass 2: flash attention + fused output projection -----------------
    kernel = _make_attn_kernel(n_heads, dqk_p, 1.0 / math.sqrt(dim_qk),
                               S, t, needs_kv_mask)
    out = pl.pallas_call(
        kernel,
        out_shape=jax.ShapeDtypeStruct((B, s_pad, d_out), query.dtype),
        grid_spec=pltpu.PrefetchScalarGridSpec(
            num_scalar_prefetch=0,
            grid=(B, n_s, n_s),
            in_specs=[
                pl.BlockSpec((1, t, hd_p), lambda b, qi, ki: (b, qi, 0)),  # Qp
                pl.BlockSpec((1, t, hd_p), lambda b, qi, ki: (b, ki, 0)),  # Kp
                pl.BlockSpec((1, t, hd_p), lambda b, qi, ki: (b, ki, 0)),  # Vp
                # Constant block index -> weights/bias resident in VMEM.
                pl.BlockSpec((hd_p, d_out), lambda b, qi, ki: (0, 0)),     # WpT
                pl.BlockSpec((1, d_out), lambda b, qi, ki: (0, 0)),        # bias
            ],
            out_specs=pl.BlockSpec((1, t, d_out),
                                   lambda b, qi, ki: (b, qi, 0)),
            scratch_shapes=[
                pltpu.VMEM((n_heads, t, 1), jnp.float32),   # running max m
                pltpu.VMEM((n_heads, t, 1), jnp.float32),   # running sum l
                pltpu.VMEM((t, hd_p), jnp.float32),         # packed p@v acc
            ],
        ),
        compiler_params=pltpu.CompilerParams(
            dimension_semantics=("parallel", "parallel", "arbitrary")),
    )(qp, kp, vp, wpT, bias)

    out = out[:, :S, :dim_in]
    if return_att:
        return out, [None]
    return out


def init_params(key, n_mixed, dim_in, dim_qk):
    ks = jax.random.split(key, 5)
    s_qk = 1.0 / math.sqrt(dim_in)
    s_pr = 1.0 / math.sqrt(n_mixed * dim_qk)
    wq = jax.random.uniform(ks[0], (n_mixed, dim_in, dim_qk), jnp.float32, -s_qk, s_qk)
    wk = jax.random.uniform(ks[1], (n_mixed, dim_in, dim_qk), jnp.float32, -s_qk, s_qk)
    wv = jax.random.uniform(ks[2], (n_mixed, dim_in, dim_qk), jnp.float32, -s_qk, s_qk)
    w_proj = jax.random.uniform(ks[3], (dim_in, n_mixed * dim_qk), jnp.float32, -s_pr, s_pr)
    b_proj = jax.random.uniform(ks[4], (dim_in,), jnp.float32, -s_pr, s_pr)
    return wq, wk, wv, w_proj, b_proj


def _reference(query, key, value, params):
    # Plain-JAX reference of the same math, for a sanity check.
    wq, wk, wv, w_proj, b_proj = params
    outs = []
    for h in range(wq.shape[0]):
        qh = query @ wq[h]
        kh = key @ wk[h]
        vh = value @ wv[h]
        s = (qh @ jnp.swapaxes(kh, -1, -2)) / math.sqrt(wq.shape[-1])
        p = jax.nn.softmax(s, axis=-1)
        outs.append(p @ vh)
    cat = jnp.concatenate(outs, axis=-1)
    return cat @ w_proj.T + b_proj


if __name__ == "__main__":
    # heads list of length 4  ->  len(heads) - 1 = 3 mixed heads
    B, S, dim_in, dim_qk, n_mixed = 2, 8, 32, 16, 3

    root = jax.random.PRNGKey(0)
    k_q, k_k, k_v, k_p = jax.random.split(root, 4)
    query = jax.random.normal(k_q, (B, S, dim_in), jnp.float32)
    key = jax.random.normal(k_k, (B, S, dim_in), jnp.float32)
    value = jax.random.normal(k_v, (B, S, dim_in), jnp.float32)
    params = init_params(k_p, n_mixed, dim_in, dim_qk)

    out, att = attention_selector(query, key, value, params, mask=None, return_att=True)
    out = jax.block_until_ready(out)

    ref = _reference(query, key, value, params)
    assert out.shape == (B, S, dim_in)
    assert att == [None]
    # bf16 MXU operands (f32 accumulation) -> slightly looser tolerance.
    assert jnp.allclose(out, ref, atol=1e-2, rtol=1e-2)

    # Second config exercising larger tiles (single 256 tile per axis here).
    B2, S2 = 2, 256
    q2 = jax.random.normal(jax.random.PRNGKey(1), (B2, S2, dim_in), jnp.float32)
    k2 = jax.random.normal(jax.random.PRNGKey(2), (B2, S2, dim_in), jnp.float32)
    v2 = jax.random.normal(jax.random.PRNGKey(3), (B2, S2, dim_in), jnp.float32)
    out2 = attention_selector(q2, k2, v2, params, return_att=False)
    out2 = jax.block_until_ready(out2)
    ref2 = _reference(q2, k2, v2, params)
    assert jnp.allclose(out2, ref2, atol=1e-2, rtol=1e-2)

    print("KERNEL_OK")
</pallas_src>

<mosaic_0001>
module attributes {stable_mosaic.version = 11 : i64} {
  func.func @_qkv_proj_kernel(%arg0: i32, %arg1: i32, %arg2: memref<1x8x128xf32, #tpu.memory_space<vmem>>, %arg3: memref<1x8x128xf32, #tpu.memory_space<vmem>>, %arg4: memref<1x8x128xf32, #tpu.memory_space<vmem>>, %arg5: memref<3x128x384xbf16, #tpu.memory_space<vmem>>, %arg6: memref<1x8x384xbf16, #tpu.memory_space<vmem>>, %arg7: memref<1x8x384xbf16, #tpu.memory_space<vmem>>, %arg8: memref<1x8x384xbf16, #tpu.memory_space<vmem>>) attributes {dimension_semantics = [#tpu.dimension_semantics<parallel>, #tpu.dimension_semantics<parallel>], iteration_bounds = array<i64: 2, 1>, scalar_prefetch = 0 : i64, scratch_operands = 0 : i64, tpu.core_type = #tpu.core_type<tc>, window_params = [{transform_indices = @transform_0, window_bounds = array<i64: 1, 8, 128>}, {transform_indices = @transform_1, window_bounds = array<i64: 1, 8, 128>}, {transform_indices = @transform_2, window_bounds = array<i64: 1, 8, 128>}, {pipeline_mode = #tpu.pipeline_mode<synchronous>, transform_indices = @transform_3, window_bounds = array<i64: 3, 128, 384>}, {transform_indices = @transform_4, window_bounds = array<i64: 1, 8, 384>}, {transform_indices = @transform_5, window_bounds = array<i64: 1, 8, 384>}, {transform_indices = @transform_6, window_bounds = array<i64: 1, 8, 384>}]} {
    %c0 = arith.constant 0 : index
    %c0_0 = arith.constant 0 : index
    %c0_1 = arith.constant 0 : index
    %0 = vector.load %arg2[%c0, %c0_0, %c0_1] : memref<1x8x128xf32, #tpu.memory_space<vmem>>, vector<1x8x128xf32>
    %1 = vector.shape_cast %0 : vector<1x8x128xf32> to vector<8x128xf32>
    %2 = arith.truncf %1 : vector<8x128xf32> to vector<8x128xbf16>
    %c0_2 = arith.constant 0 : index
    %c0_3 = arith.constant 0 : index
    %c0_4 = arith.constant 0 : index
    %3 = vector.load %arg3[%c0_2, %c0_3, %c0_4] : memref<1x8x128xf32, #tpu.memory_space<vmem>>, vector<1x8x128xf32>
    %4 = vector.shape_cast %3 : vector<1x8x128xf32> to vector<8x128xf32>
    %5 = arith.truncf %4 : vector<8x128xf32> to vector<8x128xbf16>
    %c0_5 = arith.constant 0 : index
    %c0_6 = arith.constant 0 : index
    %c0_7 = arith.constant 0 : index
    %6 = vector.load %arg4[%c0_5, %c0_6, %c0_7] : memref<1x8x128xf32, #tpu.memory_space<vmem>>, vector<1x8x128xf32>
    %7 = vector.shape_cast %6 : vector<1x8x128xf32> to vector<8x128xf32>
    %8 = arith.truncf %7 : vector<8x128xf32> to vector<8x128xbf16>
    %c0_8 = arith.constant 0 : index
    %c0_9 = arith.constant 0 : index
    %c0_10 = arith.constant 0 : index
    %9 = vector.load %arg5[%c0_8, %c0_9, %c0_10] : memref<3x128x384xbf16, #tpu.memory_space<vmem>>, vector<1x128x384xbf16>
    %10 = vector.shape_cast %9 : vector<1x128x384xbf16> to vector<128x384xbf16>
    %cst = arith.constant dense<0.000000e+00> : vector<8x384xf32>
    %11 = tpu.matmul %2, %10, %cst {dimension_numbers = #tpu.dot_dimension_numbers<[1], [0], [0], [1], [0, 0, 1, 1], [], []>} : vector<8x128xbf16>, vector<128x384xbf16>, vector<8x384xf32> -> vector<8x384xf32>
    %12 = arith.truncf %11 : vector<8x384xf32> to vector<8x384xbf16>
    %c0_11 = arith.constant 0 : index
    %c0_12 = arith.constant 0 : index
    %c0_13 = arith.constant 0 : index
    %13 = vector.load %arg6[%c0_11, %c0_12, %c0_13] : memref<1x8x384xbf16, #tpu.memory_space<vmem>>, vector<1x8x384xbf16>
    %14 = vector.shape_cast %13 : vector<1x8x384xbf16> to vector<8x384xbf16>
    %15 = vector.shape_cast %12 : vector<8x384xbf16> to vector<1x8x384xbf16>
    tpu.vector_store %arg6[%c0_11, %c0_12, %c0_13], %15 {strides = array<i32>} : memref<1x8x384xbf16, #tpu.memory_space<vmem>>, vector<1x8x384xbf16>,
    %c1 = arith.constant 1 : index
    %c0_14 = arith.constant 0 : index
    %c0_15 = arith.constant 0 : index
    %16 = vector.load %arg5[%c1, %c0_14, %c0_15] : memref<3x128x384xbf16, #tpu.memory_space<vmem>>, vector<1x128x384xbf16>
    %17 = vector.shape_cast %16 : vector<1x128x384xbf16> to vector<128x384xbf16>
    %cst_16 = arith.constant dense<0.000000e+00> : vector<8x384xf32>
    %18 = tpu.matmul %5, %17, %cst_16 {dimension_numbers = #tpu.dot_dimension_numbers<[1], [0], [0], [1], [0, 0, 1, 1], [], []>} : vector<8x128xbf16>, vector<128x384xbf16>, vector<8x384xf32> -> vector<8x384xf32>
    %19 = arith.truncf %18 : vector<8x384xf32> to vector<8x384xbf16>
    %c0_17 = arith.constant 0 : index
    %c0_18 = arith.constant 0 : index
    %c0_19 = arith.constant 0 : index
    %20 = vector.load %arg7[%c0_17, %c0_18, %c0_19] : memref<1x8x384xbf16, #tpu.memory_space<vmem>>, vector<1x8x384xbf16>
    %21 = vector.shape_cast %20 : vector<1x8x384xbf16> to vector<8x384xbf16>
    %22 = vector.shape_cast %19 : vector<8x384xbf16> to vector<1x8x384xbf16>
    tpu.vector_store %arg7[%c0_17, %c0_18, %c0_19], %22 {strides = array<i32>} : memref<1x8x384xbf16, #tpu.memory_space<vmem>>, vector<1x8x384xbf16>,
    %c2 = arith.constant 2 : index
    %c0_20 = arith.constant 0 : index
    %c0_21 = arith.constant 0 : index
    %23 = vector.load %arg5[%c2, %c0_20, %c0_21] : memref<3x128x384xbf16, #tpu.memory_space<vmem>>, vector<1x128x384xbf16>
    %24 = vector.shape_cast %23 : vector<1x128x384xbf16> to vector<128x384xbf16>
    %cst_22 = arith.constant dense<0.000000e+00> : vector<8x384xf32>
    %25 = tpu.matmul %8, %24, %cst_22 {dimension_numbers = #tpu.dot_dimension_numbers<[1], [0], [0], [1], [0, 0, 1, 1], [], []>} : vector<8x128xbf16>, vector<128x384xbf16>, vector<8x384xf32> -> vector<8x384xf32>
    %26 = arith.truncf %25 : vector<8x384xf32> to vector<8x384xbf16>
    %c0_23 = arith.constant 0 : index
    %c0_24 = arith.constant 0 : index
    %c0_25 = arith.constant 0 : index
    %27 = vector.load %arg8[%c0_23, %c0_24, %c0_25] : memref<1x8x384xbf16, #tpu.memory_space<vmem>>, vector<1x8x384xbf16>
    %28 = vector.shape_cast %27 : vector<1x8x384xbf16> to vector<8x384xbf16>
    %29 = vector.shape_cast %26 : vector<8x384xbf16> to vector<1x8x384xbf16>
    tpu.vector_store %arg8[%c0_23, %c0_24, %c0_25], %29 {strides = array<i32>} : memref<1x8x384xbf16, #tpu.memory_space<vmem>>, vector<1x8x384xbf16>,
    return
  }
  func.func @transform_0(%arg0: i32, %arg1: i32) -> (i32, i32, i32) {
    %c0_i32 = arith.constant 0 : i32
    %c0_i32_0 = arith.constant 0 : i32
    return %arg0, %arg1, %c0_i32 : i32, i32, i32
  }
  func.func @transform_1(%arg0: i32, %arg1: i32) -> (i32, i32, i32) {
    %c0_i32 = arith.constant 0 : i32
    %c0_i32_0 = arith.constant 0 : i32
    return %arg0, %arg1, %c0_i32 : i32, i32, i32
  }
  func.func @transform_2(%arg0: i32, %arg1: i32) -> (i32, i32, i32) {
    %c0_i32 = arith.constant 0 : i32
    %c0_i32_0 = arith.constant 0 : i32
    return %arg0, %arg1, %c0_i32 : i32, i32, i32
  }
  func.func @transform_3(%arg0: i32, %arg1: i32) -> (i32, i32, i32) {
    %c0_i32 = arith.constant 0 : i32
    %c0_i32_0 = arith.constant 0 : i32
    %c0_i32_1 = arith.constant 0 : i32
    %c0_i32_2 = arith.constant 0 : i32
    return %c0_i32, %c0_i32_0, %c0_i32_1 : i32, i32, i32
  }
  func.func @transform_4(%arg0: i32, %arg1: i32) -> (i32, i32, i32) {
    %c0_i32 = arith.constant 0 : i32
    %c0_i32_0 = arith.constant 0 : i32
    return %arg0, %arg1, %c0_i32 : i32, i32, i32
  }
  func.func @transform_5(%arg0: i32, %arg1: i32) -> (i32, i32, i32) {
    %c0_i32 = arith.constant 0 : i32
    %c0_i32_0 = arith.constant 0 : i32
    return %arg0, %arg1, %c0_i32 : i32, i32, i32
  }
  func.func @transform_6(%arg0: i32, %arg1: i32) -> (i32, i32, i32) {
    %c0_i32 = arith.constant 0 : i32
    %c0_i32_0 = arith.constant 0 : i32
    return %arg0, %arg1, %c0_i32 : i32, i32, i32
  }
}

</mosaic_0001>

<llo_original>
// kernel: tpu_custom_call.1
$region0: #{tpu_custom_call.1}
  #allocation0 [shape = 'u32[]', space=smem, size = 0x4, offset = 0x4, fixed_abs, tag = 'smem constant byte address 0x4 - core index']
  #allocation1 [shape = 'u32[144,128]{1,0:T(1,128)}', space=vmem, size = 0x12000, scoped, tag = 'internal scratch']
  %s0 = inlined_call_operand.hbm [shape: f32[2,8,128], index: 0, kind: input, shape index: {}]
  %s1 = inlined_call_operand.hbm [shape: f32[2,8,128], index: 1, kind: input, shape index: {}]
  %s2 = inlined_call_operand.hbm [shape: f32[2,8,128], index: 2, kind: input, shape index: {}]
  %s3 = inlined_call_operand.hbm [shape: bf16[3,128,384], index: 3, kind: input, shape index: {}]
  %s4 = inlined_call_operand.hbm [shape: bf16[2,8,384], index: 4, kind: output, shape index: {0}]
  %s5 = inlined_call_operand.hbm [shape: bf16[2,8,384], index: 5, kind: output, shape index: {1}]
  %s6 = inlined_call_operand.hbm [shape: bf16[2,8,384], index: 6, kind: output, shape index: {2}]
  %7 = xla_tuple %s4, %s5, %s6
  %s8 = sld [smem:[#allocation0]]
  $region81: #{tpu_custom_call.1} parent=0
    _
  %s10 = ssub.s32 1, %s8
  %s11 = scalar_select 0, %s10, %s8
  $region1: #{tpu_custom_call.1} parent=0
    #allocation2 [shape = 'u8[8192]{0}', space=vmem, size = 0x2000, scoped, tag = 'input window, operand 0']
    #allocation3 [shape = 's32[2]{0}', space=sflag, size = 0x8, scoped, tag = 'scoped memory for tpu_custom_call.1']
    #allocation4 [shape = 's32[2]{0}', space=sflag, size = 0x8, scoped, tag = 'scoped memory for tpu_custom_call.1']
    #allocation5 [shape = 'u8[8192]{0}', space=vmem, size = 0x2000, scoped, tag = 'input window, operand 1']
    #allocation6 [shape = 's32[2]{0}', space=sflag, size = 0x8, scoped, tag = 'scoped memory for tpu_custom_call.1']
    #allocation7 [shape = 'u8[8192]{0}', space=vmem, size = 0x2000, scoped, tag = 'input window, operand 2']
    #allocation8 [shape = 'u8[294912]{0}', space=vmem, size = 0x48000, scoped, tag = 'input window, operand 3, single buffered']
    #allocation9 [shape = 's32[1]{0}', space=sflag, size = 0x4, scoped, tag = 'scoped memory for tpu_custom_call.1']
    #allocation10 [shape = 'u8[12288]{0}', space=vmem, size = 0x3000, scoped, tag = 'output window, operand 0']
    #allocation11 [shape = 'u8[12288]{0}', space=vmem, size = 0x3000, scoped, tag = 'output window, operand 1']
    #allocation12 [shape = 's32[2]{0}', space=sflag, size = 0x8, scoped, tag = 'scoped memory for tpu_custom_call.1']
    #allocation13 [shape = 'u8[12288]{0}', space=vmem, size = 0x3000, scoped, tag = 'output window, operand 2']
    %12 = vsyncpa [#allocation3], 0
    %s13 = scalar_lea.sflag [#allocation3], 1
    %14 = vsyncpa %s13, 0
    %15 = vsyncpa [#allocation6], 0
    %s16 = scalar_lea.sflag [#allocation6], 1
    %17 = vsyncpa %s16, 0
    %18 = vsyncpa [#allocation9], 0
    %19 = vsyncpa [#allocation4], 0
    %s20 = scalar_lea.sflag [#allocation4], 1
    %21 = vsyncpa %s20, 0
    %22 = vsyncpa [#allocation12], 0
    %s23 = scalar_lea.sflag [#allocation12], 1
    %24 = vsyncpa %s23, 0
    loop: start=0, step=1, limit=4
    $region2: #{tpu_custom_call.1} parent=1 // loop_pre_header
      _
    $region3: #{tpu_custom_call.1} parent=1 // loop_header
      %s26 = sphi 0, %s30
      %p27 = scmp.ge.s32.totalorder %s26, 4
      %s33 = sphi 0, %s45
      %s34 = sphi 0, %s41
      %s35 = sphi 0, %s33
      %s36 = sphi 0, %s34
      %s37 = sphi 0, %s35
      %s38 = sphi 0, %s36
      %s50 = sphi 0, %s52
      %s53 = sphi 0, %s50
      %s54 = sphi 0, %s53
      %s70 = sphi 0, %s54
      %s78 = sphi 0, %s80
      %s81 = sphi 0, %s78
      %s82 = sphi 0, %s81
      %s98 = sphi 0, %s82
      %s106 = sphi 0, %s108
      %s109 = sphi 0, %s106
      %s110 = sphi 0, %s109
      %s126 = sphi 0, %s110
      %s130 = sphi 0, %s130
      %s132 = sphi 0, %s130
      %s133 = sphi 0, %s132
      %s147 = sphi 0, %s133
      %s155 = sphi 0, %s157
      %s158 = sphi 0, %s155
      %s159 = sphi 0, %s158
      %s175 = sphi 0, %s159
      %s183 = sphi 0, %s185
      %s186 = sphi 0, %s183
      %s187 = sphi 0, %s186
      %s203 = sphi 0, %s187
      %s211 = sphi 0, %s213
      %s214 = sphi 0, %s211
      %s215 = sphi 0, %s214
      %s231 = sphi 0, %s215
    $region4: #{tpu_custom_call.1} parent=1 // loop_header_branch
      %29 = sbr.rel (%p27) target = $region8
    $region5: #{tpu_custom_call.1} parent=1 // loop_body
      %s31 = ssub.s32 %s26, 1
      %s32 = ssub.s32 %s26, 2
      %s39 = sadd.s32 1, %s34
      %p40 = scmp.ge.s32.totalorder %s39, 1
      %s41 = scalar_select %p40, 0, %s39
      %s42 = sadd.s32 1, %s33
      %s43 = scalar_select %p40, %s42, %s33
      %p44 = scmp.ge.s32.totalorder %s43, 2
      %s45 = scalar_select %p44, 0, %s43
      %s46 = ssub.s32 %s33, %s45
      %s47 = ssub.s32 %s34, %s41
      %s48 = sor.u32 %s46, %s47
      %p49 = scmp.eq.s32.totalorder %s48, 0
      %s51 = sadd.s32 %s50, 1
      %s52 = scalar_select %p49, %s50, %s51
      %p55 = pneg %p49
      %p56 = scmp.eq.s32.totalorder %s26, 1
      %p57 = por %p55, %p56
      %p58 = scmp.ne.s32.totalorder %s50, %s53
      %p59 = scmp.eq.s32.totalorder %s26, 0
      %p60 = por %p58, %p59
      %p61 = scmp.ne.s32.totalorder %s50, %s53
      %p62 = scmp.eq.s32.totalorder %s31, 1
      %p63 = por %p61, %p62
      %p64 = scmp.ne.s32.totalorder %s53, %s54
      %p65 = scmp.eq.s32.totalorder %s31, 0
      %p66 = por %p64, %p65
      %p67 = scmp.ne.s32.totalorder %s53, %s54
      %p68 = scmp.eq.s32.totalorder %s32, 1
      %p69 = por %p67, %p68
      %p71 = scmp.ne.s32.totalorder %s54, %s70
      %p72 = scmp.eq.s32.totalorder %s32, 0
      %p73 = por %p71, %p72
      %s74 = ssub.s32 %s33, %s45
      %s75 = ssub.s32 %s34, %s41
      %s76 = sor.u32 %s74, %s75
      %p77 = scmp.eq.s32.totalorder %s76, 0
      %s79 = sadd.s32 %s78, 1
      %s80 = scalar_select %p77, %s78, %s79
      %p83 = pneg %p77
      %p84 = scmp.eq.s32.totalorder %s26, 1
      %p85 = por %p83, %p84
      %p86 = scmp.ne.s32.totalorder %s78, %s81
      %p87 = scmp.eq.s32.totalorder %s26, 0
      %p88 = por %p86, %p87
      %p89 = scmp.ne.s32.totalorder %s78, %s81
      %p90 = scmp.eq.s32.totalorder %s31, 1
      %p91 = por %p89, %p90
      %p92 = scmp.ne.s32.totalorder %s81, %s82
      %p93 = scmp.eq.s32.totalorder %s31, 0
      %p94 = por %p92, %p93
      %p95 = scmp.ne.s32.totalorder %s81, %s82
      %p96 = scmp.eq.s32.totalorder %s32, 1
      %p97 = por %p95, %p96
      %p99 = scmp.ne.s32.totalorder %s82, %s98
      %p100 = scmp.eq.s32.totalorder %s32, 0
      %p101 = por %p99, %p100
      %s102 = ssub.s32 %s33, %s45
      %s103 = ssub.s32 %s34, %s41
      %s104 = sor.u32 %s102, %s103
      %p105 = scmp.eq.s32.totalorder %s104, 0
      %s107 = sadd.s32 %s106, 1
      %s108 = scalar_select %p105, %s106, %s107
      %p111 = pneg %p105
      %p112 = scmp.eq.s32.totalorder %s26, 1
      %p113 = por %p111, %p112
      %p114 = scmp.ne.s32.totalorder %s106, %s109
      %p115 = scmp.eq.s32.totalorder %s26, 0
      %p116 = por %p114, %p115
      %p117 = scmp.ne.s32.totalorder %s106, %s109
      %p118 = scmp.eq.s32.totalorder %s31, 1
      %p119 = por %p117, %p118
      %p120 = scmp.ne.s32.totalorder %s109, %s110
      %p121 = scmp.eq.s32.totalorder %s31, 0
      %p122 = por %p120, %p121
      %p123 = scmp.ne.s32.totalorder %s109, %s110
      %p124 = scmp.eq.s32.totalorder %s32, 1
      %p125 = por %p123, %p124
      %p127 = scmp.ne.s32.totalorder %s110, %s126
      %p128 = scmp.eq.s32.totalorder %s32, 0
      %p129 = por %p127, %p128
      %s131 = sadd.s32 %s130, 1
      %p134 = scmp.eq.s32.totalorder %s26, 1
      %p135 = scmp.ne.s32.totalorder %s130, %s132
      %p136 = scmp.eq.s32.totalorder %s26, 0
      %p137 = por %p135, %p136
      %p138 = scmp.ne.s32.totalorder %s130, %s132
      %p139 = scmp.eq.s32.totalorder %s31, 1
      %p140 = por %p138, %p139
      %p141 = scmp.ne.s32.totalorder %s132, %s133
      %p142 = scmp.eq.s32.totalorder %s31, 0
      %p143 = por %p141, %p142
      %p144 = scmp.ne.s32.totalorder %s132, %s133
      %p145 = scmp.eq.s32.totalorder %s32, 1
      %p146 = por %p144, %p145
      %p148 = scmp.ne.s32.totalorder %s133, %s147
      %p149 = scmp.eq.s32.totalorder %s32, 0
      %p150 = por %p148, %p149
      %s151 = ssub.s32 %s33, %s45
      %s152 = ssub.s32 %s34, %s41
      %s153 = sor.u32 %s151, %s152
      %p154 = scmp.eq.s32.totalorder %s153, 0
      %s156 = sadd.s32 %s155, 1
      %s157 = scalar_select %p154, %s155, %s156
      %p160 = pneg %p154
      %p161 = scmp.eq.s32.totalorder %s26, 1
      %p162 = por %p160, %p161
      %p163 = scmp.ne.s32.totalorder %s155, %s158
      %p164 = scmp.eq.s32.totalorder %s26, 0
      %p165 = por %p163, %p164
      %p166 = scmp.ne.s32.totalorder %s155, %s158
      %p167 = scmp.eq.s32.totalorder %s31, 1
      %p168 = por %p166, %p167
      %p169 = scmp.ne.s32.totalorder %s158, %s159
      %p170 = scmp.eq.s32.totalorder %s31, 0
      %p171 = por %p169, %p170
      %p172 = scmp.ne.s32.totalorder %s158, %s159
      %p173 = scmp.eq.s32.totalorder %s32, 1
      %p174 = por %p172, %p173
      %p176 = scmp.ne.s32.totalorder %s159, %s175
      %p177 = scmp.eq.s32.totalorder %s32, 0
      %p178 = por %p176, %p177
      %s179 = ssub.s32 %s33, %s45
      %s180 = ssub.s32 %s34, %s41
      %s181 = sor.u32 %s179, %s180
      %p182 = scmp.eq.s32.totalorder %s181, 0
      %s184 = sadd.s32 %s183, 1
      %s185 = scalar_select %p182, %s183, %s184
      %p188 = pneg %p182
      %p189 = scmp.eq.s32.totalorder %s26, 1
      %p190 = por %p188, %p189
      %p191 = scmp.ne.s32.totalorder %s183, %s186
      %p192 = scmp.eq.s32.totalorder %s26, 0
      %p193 = por %p191, %p192
      %p194 = scmp.ne.s32.totalorder %s183, %s186
      %p195 = scmp.eq.s32.totalorder %s31, 1
      %p196 = por %p194, %p195
      %p197 = scmp.ne.s32.totalorder %s186, %s187
      %p198 = scmp.eq.s32.totalorder %s31, 0
      %p199 = por %p197, %p198
      %p200 = scmp.ne.s32.totalorder %s186, %s187
      %p201 = scmp.eq.s32.totalorder %s32, 1
      %p202 = por %p200, %p201
      %p204 = scmp.ne.s32.totalorder %s187, %s203
      %p205 = scmp.eq.s32.totalorder %s32, 0
      %p206 = por %p204, %p205
      %s207 = ssub.s32 %s33, %s45
      %s208 = ssub.s32 %s34, %s41
      %s209 = sor.u32 %s207, %s208
      %p210 = scmp.eq.s32.totalorder %s209, 0
      %s212 = sadd.s32 %s211, 1
      %s213 = scalar_select %p210, %s211, %s212
      %p216 = pneg %p210
      %p217 = scmp.eq.s32.totalorder %s26, 1
      %p218 = por %p216, %p217
      %p219 = scmp.ne.s32.totalorder %s211, %s214
      %p220 = scmp.eq.s32.totalorder %s26, 0
      %p221 = por %p219, %p220
      %p222 = scmp.ne.s32.totalorder %s211, %s214
      %p223 = scmp.eq.s32.totalorder %s31, 1
      %p224 = por %p222, %p223
      %p225 = scmp.ne.s32.totalorder %s214, %s215
      %p226 = scmp.eq.s32.totalorder %s31, 0
      %p227 = por %p225, %p226
      %p228 = scmp.ne.s32.totalorder %s214, %s215
      %p229 = scmp.eq.s32.totalorder %s32, 1
      %p230 = por %p228, %p229
      %p232 = scmp.ne.s32.totalorder %s215, %s231
      %p233 = scmp.eq.s32.totalorder %s32, 0
      %p234 = por %p232, %p233
      %p235 = scmp.le.s32.totalorder 1, %s26
      %p236 = scmp.lt.s32.totalorder %s26, 3
      %p237 = pnand %p235, %p236
      %p238 = pneg %p237
      // Predicated region
      $region9: #{tpu_custom_call.1} parent=5 // pred_check
        _
      $region10: #{tpu_custom_call.1} parent=5 // pred_check_branch
        %240 = sbr.rel (%p237) target = $region12
      $region11: #{tpu_custom_call.1} parent=5 // pred_region
        %s241 = ssub.s32 %s26, 1
        // Predicated region
        $region13: #{tpu_custom_call.1} parent=11 // pred_check
          %p242 = pneg %p143
        $region14: #{tpu_custom_call.1} parent=11 // pred_check_branch
          %244 = sbr.rel (%p242) target = $region16
        $region15: #{tpu_custom_call.1} parent=11 // pred_region
          %s246 = ssub.s32 9216, 9216
          %247 = vsyncadd [#allocation9], %s246
          %s248 = sshll.u32 [#allocation8], 4
          %s249 = int_to_ptr.vmem [resolvable:$true] %s248
          %254 = dma.hbm_to_vmem [thread:$0]  %s3, 9216, %s249, [#allocation9], 192, 192, 12
        $region16: #{tpu_custom_call.1} parent=11 // pred_fallthru
          _
      $region12: #{tpu_custom_call.1} parent=5 // pred_fallthru
        _
      %p255 = scmp.lt.s32.totalorder %s26, 2
      // Predicated region
      $region17: #{tpu_custom_call.1} parent=5 // pred_check
        %p256 = pneg %p255
      $region18: #{tpu_custom_call.1} parent=5 // pred_check_branch
        %258 = sbr.rel (%p256) target = $region20
      $region19: #{tpu_custom_call.1} parent=5 // pred_region
        // Predicated region
        $region21: #{tpu_custom_call.1} parent=19 // pred_check
          %p259 = pneg %p60
        $region22: #{tpu_custom_call.1} parent=19 // pred_check_branch
          %261 = sbr.rel (%p259) target = $region24
        $region23: #{tpu_custom_call.1} parent=19 // pred_region
          %s262 = sand.u32 %s50, 1
          %s263 = scalar_lea.sflag [#allocation3], %s262
          %s264 = sand.u32 %s50, 1
          %s265 = smul.addr %s264, 8
          %s266 = scalar_lea.vmem [#allocation2], %s265
          %s268 = ssub.s32 128, 128
          %269 = vsyncadd %s263, %s268
          %s270 = sadd.s32 %s34, %s33
          %s271 = smul.addr %s270, 128
          %s272 = scalar_lea.hbm %s0, %s271
          %s274 = sshll.u32 %s266, 4
          %s275 = int_to_ptr.vmem [resolvable:$true] %s274
          %277 = dma.hbm_to_vmem [thread:$0]  %s272, 128, %s275, %s263
        $region24: #{tpu_custom_call.1} parent=19 // pred_fallthru
          _
        // Predicated region
        $region25: #{tpu_custom_call.1} parent=19 // pred_check
          %p278 = pneg %p88
        $region26: #{tpu_custom_call.1} parent=19 // pred_check_branch
          %280 = sbr.rel (%p278) target = $region28
        $region27: #{tpu_custom_call.1} parent=19 // pred_region
          %s281 = sand.u32 %s26, 1
          %s282 = scalar_lea.sflag [#allocation6], %s281
          %s283 = sand.u32 %s78, 1
          %s284 = smul.addr %s283, 8
          %s285 = scalar_lea.vmem [#allocation5], %s284
          %s287 = ssub.s32 128, 128
          %288 = vsyncadd %s282, %s287
          %s289 = sadd.s32 %s34, %s33
          %s290 = smul.addr %s289, 128
          %s291 = scalar_lea.hbm %s1, %s290
          %s293 = sshll.u32 %s285, 4
          %s294 = int_to_ptr.vmem [resolvable:$true] %s293
          %296 = dma.hbm_to_vmem [thread:$0]  %s291, 128, %s294, %s282
        $region28: #{tpu_custom_call.1} parent=19 // pred_fallthru
          _
        // Predicated region
        $region29: #{tpu_custom_call.1} parent=19 // pred_check
          %p297 = pneg %p116
        $region30: #{tpu_custom_call.1} parent=19 // pred_check_branch
          %299 = sbr.rel (%p297) target = $region32
        $region31: #{tpu_custom_call.1} parent=19 // pred_region
          %s300 = sand.u32 %s26, 1
          %s301 = scalar_lea.sflag [#allocation6], %s300
          %s302 = sand.u32 %s106, 1
          %s303 = smul.addr %s302, 8
          %s304 = scalar_lea.vmem [#allocation7], %s303
          %s306 = ssub.s32 128, 128
          %307 = vsyncadd %s301, %s306
          %s308 = sadd.s32 %s34, %s33
          %s309 = smul.addr %s308, 128
          %s310 = scalar_lea.hbm %s2, %s309
          %s312 = sshll.u32 %s304, 4
          %s313 = int_to_ptr.vmem [resolvable:$true] %s312
          %315 = dma.hbm_to_vmem [thread:$0]  %s310, 128, %s313, %s301
        $region32: #{tpu_custom_call.1} parent=19 // pred_fallthru
          _
      $region20: #{tpu_custom_call.1} parent=5 // pred_fallthru
        _
      %p316 = scmp.le.s32.totalorder 1, %s26
      %p317 = scmp.lt.s32.totalorder %s26, 3
      %p318 = pnand %p316, %p317
      %p319 = pneg %p318
      // Predicated region
      $region33: #{tpu_custom_call.1} parent=5 // pred_check
        _
      $region34: #{tpu_custom_call.1} parent=5 // pred_check_branch
        %321 = sbr.rel (%p318) target = $region36
      $region35: #{tpu_custom_call.1} parent=5 // pred_region
        %s322 = ssub.s32 %s26, 1
        %s323 = sand.u32 %s53, 1
        %s324 = scalar_lea.sflag [#allocation3], %s323
        %s325 = sand.u32 %s53, 1
        %s326 = smul.addr %s325, 8
        %s327 = scalar_lea.vmem [#allocation2], %s326
        // Predicated region
        $region37: #{tpu_custom_call.1} parent=35 // pred_check
          %p328 = pneg %p66
        $region38: #{tpu_custom_call.1} parent=35 // pred_check_branch
          %330 = sbr.rel (%p328) target = $region40
        $region39: #{tpu_custom_call.1} parent=35 // pred_region
          %331 = dma.done %s324, 128
        $region40: #{tpu_custom_call.1} parent=35 // pred_fallthru
          _
        %s332 = sand.u32 %s31, 1
        %s333 = scalar_lea.sflag [#allocation6], %s332
        %s334 = sand.u32 %s81, 1
        %s335 = smul.addr %s334, 8
        %s336 = scalar_lea.vmem [#allocation5], %s335
        // Predicated region
        $region41: #{tpu_custom_call.1} parent=35 // pred_check
          %p337 = pneg %p94
        $region42: #{tpu_custom_call.1} parent=35 // pred_check_branch
          %339 = sbr.rel (%p337) target = $region44
        $region43: #{tpu_custom_call.1} parent=35 // pred_region
          %340 = dma.done %s333, 128
        $region44: #{tpu_custom_call.1} parent=35 // pred_fallthru
          _
        %s341 = sand.u32 %s31, 1
        %s342 = scalar_lea.sflag [#allocation6], %s341
        %s343 = sand.u32 %s109, 1
        %s344 = smul.addr %s343, 8
        %s345 = scalar_lea.vmem [#allocation7], %s344
        // Predicated region
        $region45: #{tpu_custom_call.1} parent=35 // pred_check
          %p346 = pneg %p122
        $region46: #{tpu_custom_call.1} parent=35 // pred_check_branch
          %348 = sbr.rel (%p346) target = $region48
        $region47: #{tpu_custom_call.1} parent=35 // pred_region
          %349 = dma.done %s342, 128
        $region48: #{tpu_custom_call.1} parent=35 // pred_fallthru
          _
        // Predicated region
        $region49: #{tpu_custom_call.1} parent=35 // pred_check
          %p350 = pneg %p143
        $region50: #{tpu_custom_call.1} parent=35 // pred_check_branch
          %352 = sbr.rel (%p350) target = $region52
        $region51: #{tpu_custom_call.1} parent=35 // pred_region
          %353 = dma.done [#allocation9], 9216
        $region52: #{tpu_custom_call.1} parent=35 // pred_fallthru
          _
        %s354 = sand.u32 %s53, 1
        %s355 = scalar_lea.sflag [#allocation3], %s354
        %s356 = sand.u32 %s53, 1
        %s357 = smul.addr %s356, 8
        %s358 = scalar_lea.vmem [#allocation2], %s357
        %p359 = pneg %p66
        %p360 = pneg %p63
        %s361 = sand.u32 %s31, 1
        %s362 = scalar_lea.sflag [#allocation6], %s361
        %s363 = sand.u32 %s81, 1
        %s364 = smul.addr %s363, 8
        %s365 = scalar_lea.vmem [#allocation5], %s364
        %p366 = pneg %p94
        %p367 = pneg %p91
        %s368 = sand.u32 %s31, 1
        %s369 = scalar_lea.sflag [#allocation6], %s368
        %s370 = sand.u32 %s109, 1
        %s371 = smul.addr %s370, 8
        %s372 = scalar_lea.vmem [#allocation7], %s371
        %p373 = pneg %p122
        %p374 = pneg %p119
        %p375 = pneg %p143
        %p376 = pneg %p140
        %p377 = pneg %p171
        %p378 = pneg %p168
        %s379 = sand.u32 %s158, 1
        %s380 = scalar_lea.sflag [#allocation4], %s379
        %s381 = sand.u32 %s158, 1
        %s382 = smul.addr %s381, 12
        %s383 = scalar_lea.vmem [#allocation10], %s382
        %p384 = pneg %p199
        %p385 = pneg %p196
        %s386 = sand.u32 %s31, 1
        %s387 = scalar_lea.sflag [#allocation12], %s386
        %s388 = sand.u32 %s186, 1
        %s389 = smul.addr %s388, 12
        %s390 = scalar_lea.vmem [#allocation11], %s389
        %p391 = pneg %p227
        %p392 = pneg %p224
        %s393 = sand.u32 %s31, 1
        %s394 = scalar_lea.sflag [#allocation12], %s393
        %s395 = sand.u32 %s214, 1
        %s396 = smul.addr %s395, 12
        %s397 = scalar_lea.vmem [#allocation13], %s396
        %v399 = vld [vmem:[%s327] sm:$0xff]
        %v400 = vpack.c.bf16 %v399, %v399
        %v401 = vld [vmem:[%s336] sm:$0xff]
        %v402 = vpack.c.bf16 %v401, %v401
        %v403 = vld [vmem:[%s345] sm:$0xff]
        %v404 = vpack.c.bf16 %v403, %v403
        %v405 = vld [vmem:[#allocation8] sm:$0xff]
        %v406 = vld [vmem:[#allocation8 + $0x8] sm:$0xf]
        %v407 = vld [vmem:[#allocation8 + $0xc] sm:$0xff]
        %v408 = vld [vmem:[#allocation8 + $0x14] sm:$0xf]
        %v409 = vld [vmem:[#allocation8 + $0x18] sm:$0xff]
        %v410 = vld [vmem:[#allocation8 + $0x20] sm:$0xf]
        %v411 = vld [vmem:[#allocation8 + $0x24] sm:$0xff]
        %v412 = vld [vmem:[#allocation8 + $0x2c] sm:$0xf]
        %v413 = vld [vmem:[#allocation8 + $0x30] sm:$0xff]
        %v414 = vld [vmem:[#allocation8 + $0x38] sm:$0xf]
        %v415 = vld [vmem:[#allocation8 + $0x3c] sm:$0xff]
        %v416 = vld [vmem:[#allocation8 + $0x44] sm:$0xf]
        %v417 = vld [vmem:[#allocation8 + $0x48] sm:$0xff]
        %v418 = vld [vmem:[#allocation8 + $0x50] sm:$0xf]
        %v419 = vld [vmem:[#allocation8 + $0x54] sm:$0xff]
        %v420 = vld [vmem:[#allocation8 + $0x5c] sm:$0xf]
        %v421 = vld [vmem:[#allocation8 + $0x60] sm:$0xff]
        %v422 = vld [vmem:[#allocation8 + $0x68] sm:$0xf]
        %v423 = vld [vmem:[#allocation8 + $0x6c] sm:$0xff]
        %v424 = vld [vmem:[#allocation8 + $0x74] sm:$0xf]
        %v425 = vld [vmem:[#allocation8 + $0x78] sm:$0xff]
        %v426 = vld [vmem:[#allocation8 + $0x80] sm:$0xf]
        %v427 = vld [vmem:[#allocation8 + $0x84] sm:$0xff]
        %v428 = vld [vmem:[#allocation8 + $0x8c] sm:$0xf]
        %v429 = vld [vmem:[#allocation8 + $0x90] sm:$0xff]
        %v430 = vld [vmem:[#allocation8 + $0x98] sm:$0xf]
        %v431 = vld [vmem:[#allocation8 + $0x9c] sm:$0xff]
        %v432 = vld [vmem:[#allocation8 + $0xa4] sm:$0xf]
        %v433 = vld [vmem:[#allocation8 + $0xa8] sm:$0xff]
        %v434 = vld [vmem:[#allocation8 + $0xb0] sm:$0xf]
        %v435 = vld [vmem:[#allocation8 + $0xb4] sm:$0xff]
        %v436 = vld [vmem:[#allocation8 + $0xbc] sm:$0xf]
        %v469 = vunpack.c.l.b16 %v405
        %v470 = vunpack.c.h.b16 %v405
        %v471 = vunpack.c.l.b16 %v406
        %v472 = vunpack.c.l.b16 %v407
        %v473 = vunpack.c.h.b16 %v407
        %v474 = vunpack.c.l.b16 %v408
        %v475 = vunpack.c.l.b16 %v409
        %v476 = vunpack.c.h.b16 %v409
        %v477 = vunpack.c.l.b16 %v410
        %v478 = vunpack.c.l.b16 %v411
        %v479 = vunpack.c.h.b16 %v411
        %v480 = vunpack.c.l.b16 %v412
        %v481 = vunpack.c.l.b16 %v413
        %v482 = vunpack.c.h.b16 %v413
        %v483 = vunpack.c.l.b16 %v414
        %v484 = vunpack.c.l.b16 %v415
        %v485 = vunpack.c.h.b16 %v415
        %v486 = vunpack.c.l.b16 %v416
        %v487 = vunpack.c.l.b16 %v417
        %v488 = vunpack.c.h.b16 %v417
        %v489 = vunpack.c.l.b16 %v418
        %v490 = vunpack.c.l.b16 %v419
        %v491 = vunpack.c.h.b16 %v419
        %v492 = vunpack.c.l.b16 %v420
        %v493 = vunpack.c.l.b16 %v421
        %v494 = vunpack.c.h.b16 %v421
        %v495 = vunpack.c.l.b16 %v422
        %v496 = vunpack.c.l.b16 %v423
        %v497 = vunpack.c.h.b16 %v423
        %v498 = vunpack.c.l.b16 %v424
        %v499 = vunpack.c.l.b16 %v425
        %v500 = vunpack.c.h.b16 %v425
        %v501 = vunpack.c.l.b16 %v426
        %v502 = vunpack.c.l.b16 %v427
        %v503 = vunpack.c.h.b16 %v427
        %v504 = vunpack.c.l.b16 %v428
        %v505 = vunpack.c.l.b16 %v429
        %v506 = vunpack.c.h.b16 %v429
        %v507 = vunpack.c.l.b16 %v430
        %v508 = vunpack.c.l.b16 %v431
        %v509 = vunpack.c.h.b16 %v431
        %v510 = vunpack.c.l.b16 %v432
        %v511 = vunpack.c.l.b16 %v433
        %v512 = vunpack.c.h.b16 %v433
        %v513 = vunpack.c.l.b16 %v434
        %v514 = vunpack.c.l.b16 %v435
        %v515 = vunpack.c.h.b16 %v435
        %v516 = vunpack.c.l.b16 %v436
        %v517 = vpack.c.b16 %v472, %v469
        %v518 = vpack.c.b16 %v473, %v470
        %v519 = vpack.c.b16 %v474, %v471
        %v520 = vpack.c.b16 %v478, %v475
        %v521 = vpack.c.b16 %v479, %v476
        %v522 = vpack.c.b16 %v480, %v477
        %v523 = vpack.c.b16 %v484, %v481
        %v524 = vpack.c.b16 %v485, %v482
        %v525 = vpack.c.b16 %v486, %v483
        %v526 = vpack.c.b16 %v490, %v487
        %v527 = vpack.c.b16 %v491, %v488
        %v528 = vpack.c.b16 %v492, %v489
        %v529 = vpack.c.b16 %v496, %v493
        %v530 = vpack.c.b16 %v497, %v494
        %v531 = vpack.c.b16 %v498, %v495
        %v532 = vpack.c.b16 %v502, %v499
        %v533 = vpack.c.b16 %v503, %v500
        %v534 = vpack.c.b16 %v504, %v501
        %v535 = vpack.c.b16 %v508, %v505
        %v536 = vpack.c.b16 %v509, %v506
        %v537 = vpack.c.b16 %v510, %v507
        %v538 = vpack.c.b16 %v514, %v511
        %v539 = vpack.c.b16 %v515, %v512
        %v540 = vpack.c.b16 %v516, %v513
        %565 = vmatprep.subr.bf16.mxu0 %v539
        %566 = vmatpush1.bf16.msra.mxu0 %v538
        %567 = vmatprep.subr.bf16.mxu0 %v536
        %568 = vmatpush1.bf16.msra.mxu0 %v535
        %569 = vmatprep.subr.bf16.mxu0 %v533
        %570 = vmatpush1.bf16.msra.mxu0 %v532
        %571 = vmatprep.subr.bf16.mxu0 %v530
        %572 = vmatpush1.bf16.msra.mxu0 %v529
        %573 = vmatprep.subr.bf16.mxu0 %v527
        %574 = vmatpush1.bf16.msra.mxu0 %v526
        %575 = vmatprep.subr.bf16.mxu0 %v524
        %576 = vmatpush1.bf16.msra.mxu0 %v523
        %577 = vmatprep.subr.bf16.mxu0 %v521
        %578 = vmatpush1.bf16.msra.mxu0 %v520
        %579 = vmatprep.subr.bf16.mxu0 %v518
        %580 = vmatpush1.bf16.msra.mxu0 %v517
        %581 = vmatprep.subr.bf16.mxu0 0
        %582 = vmatpush2.bf16.msra.mxu0 0
        %583 = vmatprep.subr.bf16.mxu0 0
        %584 = vmatpush2.bf16.msra.mxu0 0
        %585 = vmatprep.subr.bf16.mxu0 0
        %586 = vmatpush2.bf16.msra.mxu0 0
        %587 = vmatprep.subr.bf16.mxu0 0
        %588 = vmatpush2.bf16.msra.mxu0 0
        %589 = vmatprep.subr.bf16.mxu0 0
        %590 = vmatpush2.bf16.msra.mxu0 0
        %591 = vmatprep.subr.bf16.mxu0 0
        %592 = vmatpush2.bf16.msra.mxu0 0
        %593 = vmatprep.subr.bf16.mxu0 0
        %594 = vmatpush2.bf16.msra.mxu0 0
        %595 = vmatprep.subr.bf16.mxu0 0
        %596 = vmatpush2.bf16.msra.mxu0 0
        %597 = vmatprep.mubr.bf16.mxu0 0
        %598 = vmatmul.mubr.bf16.gmra.mxu0 %v400
        %v599 = vpop.f32.mrf.mxu0
        %v600 = vadd.f32 0.0, %v599
        %v601 = vpop.f32.mrf.mxu0
        %v602 = vadd.f32 0.0, %v601
        %v603 = vpop.f32.mrf.mxu0
        %v604 = vpop.f32.mrf.mxu0
        %605 = vdwg.mxu0
        %606 = vmatprep.subr.bf16.mxu0 0
        %607 = vmatpush1.bf16.msra.mxu0 %v540
        %608 = vmatprep.subr.bf16.mxu0 0
        %609 = vmatpush1.bf16.msra.mxu0 %v537
        %610 = vmatprep.subr.bf16.mxu0 0
        %611 = vmatpush1.bf16.msra.mxu0 %v534
        %612 = vmatprep.subr.bf16.mxu0 0
        %613 = vmatpush1.bf16.msra.mxu0 %v531
        %614 = vmatprep.subr.bf16.mxu0 0
        %615 = vmatpush1.bf16.msra.mxu0 %v528
        %616 = vmatprep.subr.bf16.mxu0 0
        %617 = vmatpush1.bf16.msra.mxu0 %v525
        %618 = vmatprep.subr.bf16.mxu0 0
        %619 = vmatpush1.bf16.msra.mxu0 %v522
        %620 = vmatprep.subr.bf16.mxu0 0
        %621 = vmatpush1.bf16.msra.mxu0 %v519
        %622 = vmatprep.subr.bf16.mxu0 0
        %623 = vmatpush2.bf16.msra.mxu0 0
        %624 = vmatprep.subr.bf16.mxu0 0
        %625 = vmatpush2.bf16.msra.mxu0 0
        %626 = vmatprep.subr.bf16.mxu0 0
        %627 = vmatpush2.bf16.msra.mxu0 0
        %628 = vmatprep.subr.bf16.mxu0 0
        %629 = vmatpush2.bf16.msra.mxu0 0
        %630 = vmatprep.subr.bf16.mxu0 0
        %631 = vmatpush2.bf16.msra.mxu0 0
        %632 = vmatprep.subr.bf16.mxu0 0
        %633 = vmatpush2.bf16.msra.mxu0 0
        %634 = vmatprep.subr.bf16.mxu0 0
        %635 = vmatpush2.bf16.msra.mxu0 0
        %636 = vmatprep.subr.bf16.mxu0 0
        %637 = vmatpush2.bf16.msra.mxu0 0
        %638 = vmatprep.mubr.bf16.mxu0 0
        %639 = vmatmul.mubr.bf16.gmra.mxu0 %v400
        %v640 = vpop.f32.mrf.mxu0
        %v641 = vadd.f32 0.0, %v640
        %v642 = vpop.f32.mrf.mxu0
        %v643 = vpop.f32.mrf.mxu0
        %v644 = vpop.f32.mrf.mxu0
        %645 = vdwg.mxu0
        %v646 = vpack.c.bf16 %v600, %v600
        %v647 = vpack.c.bf16 %v602, %v602
        %v648 = vpack.c.bf16 %v641, %v641
        %v652 = vunpack.c.l.b16 %v646
        %v653 = vunpack.c.l.b16 %v647
        %v654 = vunpack.c.l.b16 %v648
        %v655 = vpack.c.b16 %v653, %v652
        %v656 = vpack.c.b16 %v654, %v654
        %659 = vst [vmem:[%s383] sm:$0xff] %v655
        %660 = vst [vmem:[%s383 + $0x8] sm:$0xf] %v656
        %s661 = scalar_lea.vmem [#allocation8], 192
        %v662 = vld [vmem:[%s661] sm:$0xff]
        %v663 = vld [vmem:[%s661 + $0x8] sm:$0xf]
        %v664 = vld [vmem:[%s661 + $0xc] sm:$0xff]
        %v665 = vld [vmem:[%s661 + $0x14] sm:$0xf]
        %v666 = vld [vmem:[%s661 + $0x18] sm:$0xff]
        %v667 = vld [vmem:[%s661 + $0x20] sm:$0xf]
        %v668 = vld [vmem:[%s661 + $0x24] sm:$0xff]
        %v669 = vld [vmem:[%s661 + $0x2c] sm:$0xf]
        %v670 = vld [vmem:[%s661 + $0x30] sm:$0xff]
        %v671 = vld [vmem:[%s661 + $0x38] sm:$0xf]
        %v672 = vld [vmem:[%s661 + $0x3c] sm:$0xff]
        %v673 = vld [vmem:[%s661 + $0x44] sm:$0xf]
        %v674 = vld [vmem:[%s661 + $0x48] sm:$0xff]
        %v675 = vld [vmem:[%s661 + $0x50] sm:$0xf]
        %v676 = vld [vmem:[%s661 + $0x54] sm:$0xff]
        %v677 = vld [vmem:[%s661 + $0x5c] sm:$0xf]
        %v678 = vld [vmem:[%s661 + $0x60] sm:$0xff]
        %v679 = vld [vmem:[%s661 + $0x68] sm:$0xf]
        %v680 = vld [vmem:[%s661 + $0x6c] sm:$0xff]
        %v681 = vld [vmem:[%s661 + $0x74] sm:$0xf]
        %v682 = vld [vmem:[%s661 + $0x78] sm:$0xff]
        %v683 = vld [vmem:[%s661 + $0x80] sm:$0xf]
        %v684 = vld [vmem:[%s661 + $0x84] sm:$0xff]
        %v685 = vld [vmem:[%s661 + $0x8c] sm:$0xf]
        %v686 = vld [vmem:[%s661 + $0x90] sm:$0xff]
        %v687 = vld [vmem:[%s661 + $0x98] sm:$0xf]
        %v688 = vld [vmem:[%s661 + $0x9c] sm:$0xff]
        %v689 = vld [vmem:[%s661 + $0xa4] sm:$0xf]
        %v690 = vld [vmem:[%s661 + $0xa8] sm:$0xff]
        %v691 = vld [vmem:[%s661 + $0xb0] sm:$0xf]
        %v692 = vld [vmem:[%s661 + $0xb4] sm:$0xff]
        %v693 = vld [vmem:[%s661 + $0xbc] sm:$0xf]
        %v726 = vunpack.c.l.b16 %v662
        %v727 = vunpack.c.h.b16 %v662
        %v728 = vunpack.c.l.b16 %v663
        %v729 = vunpack.c.l.b16 %v664
        %v730 = vunpack.c.h.b16 %v664
        %v731 = vunpack.c.l.b16 %v665
        %v732 = vunpack.c.l.b16 %v666
        %v733 = vunpack.c.h.b16 %v666
        %v734 = vunpack.c.l.b16 %v667
        %v735 = vunpack.c.l.b16 %v668
        %v736 = vunpack.c.h.b16 %v668
        %v737 = vunpack.c.l.b16 %v669
        %v738 = vunpack.c.l.b16 %v670
        %v739 = vunpack.c.h.b16 %v670
        %v740 = vunpack.c.l.b16 %v671
        %v741 = vunpack.c.l.b16 %v672
        %v742 = vunpack.c.h.b16 %v672
        %v743 = vunpack.c.l.b16 %v673
        %v744 = vunpack.c.l.b16 %v674
        %v745 = vunpack.c.h.b16 %v674
        %v746 = vunpack.c.l.b16 %v675
        %v747 = vunpack.c.l.b16 %v676
        %v748 = vunpack.c.h.b16 %v676
        %v749 = vunpack.c.l.b16 %v677
        %v750 = vunpack.c.l.b16 %v678
        %v751 = vunpack.c.h.b16 %v678
        %v752 = vunpack.c.l.b16 %v679
        %v753 = vunpack.c.l.b16 %v680
        %v754 = vunpack.c.h.b16 %v680
        %v755 = vunpack.c.l.b16 %v681
        %v756 = vunpack.c.l.b16 %v682
        %v757 = vunpack.c.h.b16 %v682
        %v758 = vunpack.c.l.b16 %v683
        %v759 = vunpack.c.l.b16 %v684
        %v760 = vunpack.c.h.b16 %v684
        %v761 = vunpack.c.l.b16 %v685
        %v762 = vunpack.c.l.b16 %v686
        %v763 = vunpack.c.h.b16 %v686
        %v764 = vunpack.c.l.b16 %v687
        %v765 = vunpack.c.l.b16 %v688
        %v766 = vunpack.c.h.b16 %v688
        %v767 = vunpack.c.l.b16 %v689
        %v768 = vunpack.c.l.b16 %v690
        %v769 = vunpack.c.h.b16 %v690
        %v770 = vunpack.c.l.b16 %v691
        %v771 = vunpack.c.l.b16 %v692
        %v772 = vunpack.c.h.b16 %v692
        %v773 = vunpack.c.l.b16 %v693
        %v774 = vpack.c.b16 %v729, %v726
        %v775 = vpack.c.b16 %v730, %v727
        %v776 = vpack.c.b16 %v731, %v728
        %v777 = vpack.c.b16 %v735, %v732
        %v778 = vpack.c.b16 %v736, %v733
        %v779 = vpack.c.b16 %v737, %v734
        %v780 = vpack.c.b16 %v741, %v738
        %v781 = vpack.c.b16 %v742, %v739
        %v782 = vpack.c.b16 %v743, %v740
        %v783 = vpack.c.b16 %v747, %v744
        %v784 = vpack.c.b16 %v748, %v745
        %v785 = vpack.c.b16 %v749, %v746
        %v786 = vpack.c.b16 %v753, %v750
        %v787 = vpack.c.b16 %v754, %v751
        %v788 = vpack.c.b16 %v755, %v752
        %v789 = vpack.c.b16 %v759, %v756
        %v790 = vpack.c.b16 %v760, %v757
        %v791 = vpack.c.b16 %v761, %v758
        %v792 = vpack.c.b16 %v765, %v762
        %v793 = vpack.c.b16 %v766, %v763
        %v794 = vpack.c.b16 %v767, %v764
        %v795 = vpack.c.b16 %v771, %v768
        %v796 = vpack.c.b16 %v772, %v769
        %v797 = vpack.c.b16 %v773, %v770
        %822 = vmatprep.subr.bf16.mxu0 %v796
        %823 = vmatpush1.bf16.msra.mxu0 %v795
        %824 = vmatprep.subr.bf16.mxu0 %v793
        %825 = vmatpush1.bf16.msra.mxu0 %v792
        %826 = vmatprep.subr.bf16.mxu0 %v790
        %827 = vmatpush1.bf16.msra.mxu0 %v789
        %828 = vmatprep.subr.bf16.mxu0 %v787
        %829 = vmatpush1.bf16.msra.mxu0 %v786
        %830 = vmatprep.subr.bf16.mxu0 %v784
        %831 = vmatpush1.bf16.msra.mxu0 %v783
        %832 = vmatprep.subr.bf16.mxu0 %v781
        %833 = vmatpush1.bf16.msra.mxu0 %v780
        %834 = vmatprep.subr.bf16.mxu0 %v778
        %835 = vmatpush1.bf16.msra.mxu0 %v777
        %836 = vmatprep.subr.bf16.mxu0 %v775
        %837 = vmatpush1.bf16.msra.mxu0 %v774
        %838 = vmatprep.subr.bf16.mxu0 0
        %839 = vmatpush2.bf16.msra.mxu0 0
        %840 = vmatprep.subr.bf16.mxu0 0
        %841 = vmatpush2.bf16.msra.mxu0 0
        %842 = vmatprep.subr.bf16.mxu0 0
        %843 = vmatpush2.bf16.msra.mxu0 0
        %844 = vmatprep.subr.bf16.mxu0 0
        %845 = vmatpush2.bf16.msra.mxu0 0
        %846 = vmatprep.subr.bf16.mxu0 0
        %847 = vmatpush2.bf16.msra.mxu0 0
        %848 = vmatprep.subr.bf16.mxu0 0
        %849 = vmatpush2.bf16.msra.mxu0 0
        %850 = vmatprep.subr.bf16.mxu0 0
        %851 = vmatpush2.bf16.msra.mxu0 0
        %852 = vmatprep.subr.bf16.mxu0 0
        %853 = vmatpush2.bf16.msra.mxu0 0
        %854 = vmatprep.mubr.bf16.mxu0 0
        %855 = vmatmul.mubr.bf16.gmra.mxu0 %v402
        %v856 = vpop.f32.mrf.mxu0
        %v857 = vadd.f32 0.0, %v856
        %v858 = vpop.f32.mrf.mxu0
        %v859 = vadd.f32 0.0, %v858
        %v860 = vpop.f32.mrf.mxu0
        %v861 = vpop.f32.mrf.mxu0
        %862 = vdwg.mxu0
        %863 = vmatprep.subr.bf16.mxu0 0
        %864 = vmatpush1.bf16.msra.mxu0 %v797
        %865 = vmatprep.subr.bf16.mxu0 0
        %866 = vmatpush1.bf16.msra.mxu0 %v794
        %867 = vmatprep.subr.bf16.mxu0 0
        %868 = vmatpush1.bf16.msra.mxu0 %v791
        %869 = vmatprep.subr.bf16.mxu0 0
        %870 = vmatpush1.bf16.msra.mxu0 %v788
        %871 = vmatprep.subr.bf16.mxu0 0
        %872 = vmatpush1.bf16.msra.mxu0 %v785
        %873 = vmatprep.subr.bf16.mxu0 0
        %874 = vmatpush1.bf16.msra.mxu0 %v782
        %875 = vmatprep.subr.bf16.mxu0 0
        %876 = vmatpush1.bf16.msra.mxu0 %v779
        %877 = vmatprep.subr.bf16.mxu0 0
        %878 = vmatpush1.bf16.msra.mxu0 %v776
        %879 = vmatprep.subr.bf16.mxu0 0
        %880 = vmatpush2.bf16.msra.mxu0 0
        %881 = vmatprep.subr.bf16.mxu0 0
        %882 = vmatpush2.bf16.msra.mxu0 0
        %883 = vmatprep.subr.bf16.mxu0 0
        %884 = vmatpush2.bf16.msra.mxu0 0
        %885 = vmatprep.subr.bf16.mxu0 0
        %886 = vmatpush2.bf16.msra.mxu0 0
        %887 = vmatprep.subr.bf16.mxu0 0
        %888 = vmatpush2.bf16.msra.mxu0 0
        %889 = vmatprep.subr.bf16.mxu0 0
        %890 = vmatpush2.bf16.msra.mxu0 0
        %891 = vmatprep.subr.bf16.mxu0 0
        %892 = vmatpush2.bf16.msra.mxu0 0
        %893 = vmatprep.subr.bf16.mxu0 0
        %894 = vmatpush2.bf16.msra.mxu0 0
        %895 = vmatprep.mubr.bf16.mxu0 0
        %896 = vmatmul.mubr.bf16.gmra.mxu0 %v402
        %v897 = vpop.f32.mrf.mxu0
        %v898 = vadd.f32 0.0, %v897
        %v899 = vpop.f32.mrf.mxu0
        %v900 = vpop.f32.mrf.mxu0
        %v901 = vpop.f32.mrf.mxu0
        %902 = vdwg.mxu0
        %v903 = vpack.c.bf16 %v857, %v857
        %v904 = vpack.c.bf16 %v859, %v859
        %v905 = vpack.c.bf16 %v898, %v898
        %v909 = vunpack.c.l.b16 %v903
        %v910 = vunpack.c.l.b16 %v904
        %v911 = vunpack.c.l.b16 %v905
        %v912 = vpack.c.b16 %v910, %v909
        %v913 = vpack.c.b16 %v911, %v911
        %916 = vst [vmem:[%s390] sm:$0xff] %v912
        %917 = vst [vmem:[%s390 + $0x8] sm:$0xf] %v913
        %s918 = scalar_lea.vmem [#allocation8], 384
        %v919 = vld [vmem:[%s918] sm:$0xff]
        %v920 = vld [vmem:[%s918 + $0x8] sm:$0xf]
        %v921 = vld [vmem:[%s918 + $0xc] sm:$0xff]
        %v922 = vld [vmem:[%s918 + $0x14] sm:$0xf]
        %v923 = vld [vmem:[%s918 + $0x18] sm:$0xff]
        %v924 = vld [vmem:[%s918 + $0x20] sm:$0xf]
        %v925 = vld [vmem:[%s918 + $0x24] sm:$0xff]
        %v926 = vld [vmem:[%s918 + $0x2c] sm:$0xf]
        %v927 = vld [vmem:[%s918 + $0x30] sm:$0xff]
        %v928 = vld [vmem:[%s918 + $0x38] sm:$0xf]
        %v929 = vld [vmem:[%s918 + $0x3c] sm:$0xff]
        %v930 = vld [vmem:[%s918 + $0x44] sm:$0xf]
        %v931 = vld [vmem:[%s918 + $0x48] sm:$0xff]
        %v932 = vld [vmem:[%s918 + $0x50] sm:$0xf]
        %v933 = vld [vmem:[%s918 + $0x54] sm:$0xff]
        %v934 = vld [vmem:[%s918 + $0x5c] sm:$0xf]
        %v935 = vld [vmem:[%s918 + $0x60] sm:$0xff]
        %v936 = vld [vmem:[%s918 + $0x68] sm:$0xf]
        %v937 = vld [vmem:[%s918 + $0x6c] sm:$0xff]
        %v938 = vld [vmem:[%s918 + $0x74] sm:$0xf]
        %v939 = vld [vmem:[%s918 + $0x78] sm:$0xff]
        %v940 = vld [vmem:[%s918 + $0x80] sm:$0xf]
        %v941 = vld [vmem:[%s918 + $0x84] sm:$0xff]
        %v942 = vld [vmem:[%s918 + $0x8c] sm:$0xf]
        %v943 = vld [vmem:[%s918 + $0x90] sm:$0xff]
        %v944 = vld [vmem:[%s918 + $0x98] sm:$0xf]
        %v945 = vld [vmem:[%s918 + $0x9c] sm:$0xff]
        %v946 = vld [vmem:[%s918 + $0xa4] sm:$0xf]
        %v947 = vld [vmem:[%s918 + $0xa8] sm:$0xff]
        %v948 = vld [vmem:[%s918 + $0xb0] sm:$0xf]
        %v949 = vld [vmem:[%s918 + $0xb4] sm:$0xff]
        %v950 = vld [vmem:[%s918 + $0xbc] sm:$0xf]
        %v983 = vunpack.c.l.b16 %v919
        %v984 = vunpack.c.h.b16 %v919
        %v985 = vunpack.c.l.b16 %v920
        %v986 = vunpack.c.l.b16 %v921
        %v987 = vunpack.c.h.b16 %v921
        %v988 = vunpack.c.l.b16 %v922
        %v989 = vunpack.c.l.b16 %v923
        %v990 = vunpack.c.h.b16 %v923
        %v991 = vunpack.c.l.b16 %v924
        %v992 = vunpack.c.l.b16 %v925
        %v993 = vunpack.c.h.b16 %v925
        %v994 = vunpack.c.l.b16 %v926
        %v995 = vunpack.c.l.b16 %v927
        %v996 = vunpack.c.h.b16 %v927
        %v997 = vunpack.c.l.b16 %v928
        %v998 = vunpack.c.l.b16 %v929
        %v999 = vunpack.c.h.b16 %v929
        %v1000 = vunpack.c.l.b16 %v930
        %v1001 = vunpack.c.l.b16 %v931
        %v1002 = vunpack.c.h.b16 %v931
        %v1003 = vunpack.c.l.b16 %v932
        %v1004 = vunpack.c.l.b16 %v933
        %v1005 = vunpack.c.h.b16 %v933
        %v1006 = vunpack.c.l.b16 %v934
        %v1007 = vunpack.c.l.b16 %v935
        %v1008 = vunpack.c.h.b16 %v935
        %v1009 = vunpack.c.l.b16 %v936
        %v1010 = vunpack.c.l.b16 %v937
        %v1011 = vunpack.c.h.b16 %v937
        %v1012 = vunpack.c.l.b16 %v938
        %v1013 = vunpack.c.l.b16 %v939
        %v1014 = vunpack.c.h.b16 %v939
        %v1015 = vunpack.c.l.b16 %v940
        %v1016 = vunpack.c.l.b16 %v941
        %v1017 = vunpack.c.h.b16 %v941
        %v1018 = vunpack.c.l.b16 %v942
        %v1019 = vunpack.c.l.b16 %v943
        %v1020 = vunpack.c.h.b16 %v943
        %v1021 = vunpack.c.l.b16 %v944
        %v1022 = vunpack.c.l.b16 %v945
        %v1023 = vunpack.c.h.b16 %v945
        %v1024 = vunpack.c.l.b16 %v946
        %v1025 = vunpack.c.l.b16 %v947
        %v1026 = vunpack.c.h.b16 %v947
        %v1027 = vunpack.c.l.b16 %v948
        %v1028 = vunpack.c.l.b16 %v949
        %v1029 = vunpack.c.h.b16 %v949
        %v1030 = vunpack.c.l.b16 %v950
        %v1031 = vpack.c.b16 %v986, %v983
        %v1032 = vpack.c.b16 %v987, %v984
        %v1033 = vpack.c.b16 %v988, %v985
        %v1034 = vpack.c.b16 %v992, %v989
        %v1035 = vpack.c.b16 %v993, %v990
        %v1036 = vpack.c.b16 %v994, %v991
        %v1037 = vpack.c.b16 %v998, %v995
        %v1038 = vpack.c.b16 %v999, %v996
        %v1039 = vpack.c.b16 %v1000, %v997
        %v1040 = vpack.c.b16 %v1004, %v1001
        %v1041 = vpack.c.b16 %v1005, %v1002
        %v1042 = vpack.c.b16 %v1006, %v1003
        %v1043 = vpack.c.b16 %v1010, %v1007
        %v1044 = vpack.c.b16 %v1011, %v1008
        %v1045 = vpack.c.b16 %v1012, %v1009
        %v1046 = vpack.c.b16 %v1016, %v1013
        %v1047 = vpack.c.b16 %v1017, %v1014
        %v1048 = vpack.c.b16 %v1018, %v1015
        %v1049 = vpack.c.b16 %v1022, %v1019
        %v1050 = vpack.c.b16 %v1023, %v1020
        %v1051 = vpack.c.b16 %v1024, %v1021
        %v1052 = vpack.c.b16 %v1028, %v1025
        %v1053 = vpack.c.b16 %v1029, %v1026
        %v1054 = vpack.c.b16 %v1030, %v1027
        %1079 = vmatprep.subr.bf16.mxu0 %v1053
        %1080 = vmatpush1.bf16.msra.mxu0 %v1052
        %1081 = vmatprep.subr.bf16.mxu0 %v1050
        %1082 = vmatpush1.bf16.msra.mxu0 %v1049
        %1083 = vmatprep.subr.bf16.mxu0 %v1047
        %1084 = vmatpush1.bf16.msra.mxu0 %v1046
        %1085 = vmatprep.subr.bf16.mxu0 %v1044
        %1086 = vmatpush1.bf16.msra.mxu0 %v1043
        %1087 = vmatprep.subr.bf16.mxu0 %v1041
        %1088 = vmatpush1.bf16.msra.mxu0 %v1040
        %1089 = vmatprep.subr.bf16.mxu0 %v1038
        %1090 = vmatpush1.bf16.msra.mxu0 %v1037
        %1091 = vmatprep.subr.bf16.mxu0 %v1035
        %1092 = vmatpush1.bf16.msra.mxu0 %v1034
        %1093 = vmatprep.subr.bf16.mxu0 %v1032
        %1094 = vmatpush1.bf16.msra.mxu0 %v1031
        %1095 = vmatprep.subr.bf16.mxu0 0
        %1096 = vmatpush2.bf16.msra.mxu0 0
        %1097 = vmatprep.subr.bf16.mxu0 0
        %1098 = vmatpush2.bf16.msra.mxu0 0
        %1099 = vmatprep.subr.bf16.mxu0 0
        %1100 = vmatpush2.bf16.msra.mxu0 0
        %1101 = vmatprep.subr.bf16.mxu0 0
        %1102 = vmatpush2.bf16.msra.mxu0 0
        %1103 = vmatprep.subr.bf16.mxu0 0
        %1104 = vmatpush2.bf16.msra.mxu0 0
        %1105 = vmatprep.subr.bf16.mxu0 0
        %1106 = vmatpush2.bf16.msra.mxu0 0
        %1107 = vmatprep.subr.bf16.mxu0 0
        %1108 = vmatpush2.bf16.msra.mxu0 0
        %1109 = vmatprep.subr.bf16.mxu0 0
        %1110 = vmatpush2.bf16.msra.mxu0 0
        %1111 = vmatprep.mubr.bf16.mxu0 0
        %1112 = vmatmul.mubr.bf16.gmra.mxu0 %v404
        %v1113 = vpop.f32.mrf.mxu0
        %v1114 = vadd.f32 0.0, %v1113
        %v1115 = vpop.f32.mrf.mxu0
        %v1116 = vadd.f32 0.0, %v1115
        %v1117 = vpop.f32.mrf.mxu0
        %v1118 = vpop.f32.mrf.mxu0
        %1119 = vdwg.mxu0
        %1120 = vmatprep.subr.bf16.mxu0 0
        %1121 = vmatpush1.bf16.msra.mxu0 %v1054
        %1122 = vmatprep.subr.bf16.mxu0 0
        %1123 = vmatpush1.bf16.msra.mxu0 %v1051
        %1124 = vmatprep.subr.bf16.mxu0 0
        %1125 = vmatpush1.bf16.msra.mxu0 %v1048
        %1126 = vmatprep.subr.bf16.mxu0 0
        %1127 = vmatpush1.bf16.msra.mxu0 %v1045
        %1128 = vmatprep.subr.bf16.mxu0 0
        %1129 = vmatpush1.bf16.msra.mxu0 %v1042
        %1130 = vmatprep.subr.bf16.mxu0 0
        %1131 = vmatpush1.bf16.msra.mxu0 %v1039
        %1132 = vmatprep.subr.bf16.mxu0 0
        %1133 = vmatpush1.bf16.msra.mxu0 %v1036
        %1134 = vmatprep.subr.bf16.mxu0 0
        %1135 = vmatpush1.bf16.msra.mxu0 %v1033
        %1136 = vmatprep.subr.bf16.mxu0 0
        %1137 = vmatpush2.bf16.msra.mxu0 0
        %1138 = vmatprep.subr.bf16.mxu0 0
        %1139 = vmatpush2.bf16.msra.mxu0 0
        %1140 = vmatprep.subr.bf16.mxu0 0
        %1141 = vmatpush2.bf16.msra.mxu0 0
        %1142 = vmatprep.subr.bf16.mxu0 0
        %1143 = vmatpush2.bf16.msra.mxu0 0
        %1144 = vmatprep.subr.bf16.mxu0 0
        %1145 = vmatpush2.bf16.msra.mxu0 0
        %1146 = vmatprep.subr.bf16.mxu0 0
        %1147 = vmatpush2.bf16.msra.mxu0 0
        %1148 = vmatprep.subr.bf16.mxu0 0
        %1149 = vmatpush2.bf16.msra.mxu0 0
        %1150 = vmatprep.subr.bf16.mxu0 0
        %1151 = vmatpush2.bf16.msra.mxu0 0
        %1152 = vmatprep.mubr.bf16.mxu0 0
        %1153 = vmatmul.mubr.bf16.gmra.mxu0 %v404
        %v1154 = vpop.f32.mrf.mxu0
        %v1155 = vadd.f32 0.0, %v1154
        %v1156 = vpop.f32.mrf.mxu0
        %v1157 = vpop.f32.mrf.mxu0
        %v1158 = vpop.f32.mrf.mxu0
        %1159 = vdwg.mxu0
        %v1160 = vpack.c.bf16 %v1114, %v1114
        %v1161 = vpack.c.bf16 %v1116, %v1116
        %v1162 = vpack.c.bf16 %v1155, %v1155
        %v1166 = vunpack.c.l.b16 %v1160
        %v1167 = vunpack.c.l.b16 %v1161
        %v1168 = vunpack.c.l.b16 %v1162
        %v1169 = vpack.c.b16 %v1167, %v1166
        %v1170 = vpack.c.b16 %v1168, %v1168
        %1173 = vst [vmem:[%s397] sm:$0xff] %v1169
        %1174 = vst [vmem:[%s397 + $0x8] sm:$0xf] %v1170
        %s1175 = sand.u32 %s158, 1
        %s1176 = scalar_lea.sflag [#allocation4], %s1175
        %s1177 = sand.u32 %s158, 1
        %s1178 = smul.addr %s1177, 12
        %s1179 = scalar_lea.vmem [#allocation10], %s1178
        %s1180 = sand.u32 %s31, 1
        %s1181 = scalar_lea.sflag [#allocation12], %s1180
        %s1182 = sand.u32 %s186, 1
        %s1183 = smul.addr %s1182, 12
        %s1184 = scalar_lea.vmem [#allocation11], %s1183
        %s1185 = sand.u32 %s31, 1
        %s1186 = scalar_lea.sflag [#allocation12], %s1185
        %s1187 = sand.u32 %s214, 1
        %s1188 = smul.addr %s1187, 12
        %s1189 = scalar_lea.vmem [#allocation13], %s1188
        // Predicated region
        $region53: #{tpu_custom_call.1} parent=35 // pred_check
          %p1190 = pneg %p168
        $region54: #{tpu_custom_call.1} parent=35 // pred_check_branch
          %1192 = sbr.rel (%p1190) target = $region56
        $region55: #{tpu_custom_call.1} parent=35 // pred_region
          %s1194 = ssub.s32 192, 192
          %1195 = vsyncadd %s1176, %s1194
          %s1196 = smul.addr %s36, 3
          %s1197 = smul.addr %s35, 3
          %s1198 = sadd.s32 %s1196, %s1197
          %s1199 = smul.addr %s1198, 64
          %s1200 = scalar_lea.hbm %s4, %s1199
          %s1202 = sshll.u32 %s1179, 4
          %s1203 = int_to_ptr.vmem [resolvable:$true] %s1202
          %1205 = dma.vmem_to_hbm [thread:$0]  %s1203, 192, %s1200, %s1176
        $region56: #{tpu_custom_call.1} parent=35 // pred_fallthru
          _
        // Predicated region
        $region57: #{tpu_custom_call.1} parent=35 // pred_check
          %p1206 = pneg %p196
        $region58: #{tpu_custom_call.1} parent=35 // pred_check_branch
          %1208 = sbr.rel (%p1206) target = $region60
        $region59: #{tpu_custom_call.1} parent=35 // pred_region
          %s1210 = ssub.s32 192, 192
          %1211 = vsyncadd %s1181, %s1210
          %s1212 = smul.addr %s36, 3
          %s1213 = smul.addr %s35, 3
          %s1214 = sadd.s32 %s1212, %s1213
          %s1215 = smul.addr %s1214, 64
          %s1216 = scalar_lea.hbm %s5, %s1215
          %s1218 = sshll.u32 %s1184, 4
          %s1219 = int_to_ptr.vmem [resolvable:$true] %s1218
          %1221 = dma.vmem_to_hbm [thread:$0]  %s1219, 192, %s1216, %s1181
        $region60: #{tpu_custom_call.1} parent=35 // pred_fallthru
          _
        // Predicated region
        $region61: #{tpu_custom_call.1} parent=35 // pred_check
          %p1222 = pneg %p224
        $region62: #{tpu_custom_call.1} parent=35 // pred_check_branch
          %1224 = sbr.rel (%p1222) target = $region64
        $region63: #{tpu_custom_call.1} parent=35 // pred_region
          %s1226 = ssub.s32 192, 192
          %1227 = vsyncadd %s1186, %s1226
          %s1228 = smul.addr %s36, 3
          %s1229 = smul.addr %s35, 3
          %s1230 = sadd.s32 %s1228, %s1229
          %s1231 = smul.addr %s1230, 64
          %s1232 = scalar_lea.hbm %s6, %s1231
          %s1234 = sshll.u32 %s1189, 4
          %s1235 = int_to_ptr.vmem [resolvable:$true] %s1234
          %1237 = dma.vmem_to_hbm [thread:$0]  %s1235, 192, %s1232, %s1186
        $region64: #{tpu_custom_call.1} parent=35 // pred_fallthru
          _
      $region36: #{tpu_custom_call.1} parent=5 // pred_fallthru
        _
      %p1238 = scmp.le.s32.totalorder 2, %s26
      // Predicated region
      $region65: #{tpu_custom_call.1} parent=5 // pred_check
        %p1239 = pneg %p1238
      $region66: #{tpu_custom_call.1} parent=5 // pred_check_branch
        %1241 = sbr.rel (%p1239) target = $region68
      $region67: #{tpu_custom_call.1} parent=5 // pred_region
        %s1242 = ssub.s32 %s26, 2
        // Predicated region
        $region69: #{tpu_custom_call.1} parent=67 // pred_check
          %p1243 = pneg %p174
        $region70: #{tpu_custom_call.1} parent=67 // pred_check_branch
          %1245 = sbr.rel (%p1243) target = $region72
        $region71: #{tpu_custom_call.1} parent=67 // pred_region
          %s1246 = sand.u32 %s159, 1
          %s1247 = scalar_lea.sflag [#allocation4], %s1246
          %s1248 = sand.u32 %s159, 1
          %s1249 = smul.addr %s1248, 12
          %s1250 = scalar_lea.vmem [#allocation10], %s1249
          %1251 = dma.done %s1247, 192
        $region72: #{tpu_custom_call.1} parent=67 // pred_fallthru
          _
        // Predicated region
        $region73: #{tpu_custom_call.1} parent=67 // pred_check
          %p1252 = pneg %p202
        $region74: #{tpu_custom_call.1} parent=67 // pred_check_branch
          %1254 = sbr.rel (%p1252) target = $region76
        $region75: #{tpu_custom_call.1} parent=67 // pred_region
          %s1255 = sand.u32 %s32, 1
          %s1256 = scalar_lea.sflag [#allocation12], %s1255
          %s1257 = sand.u32 %s187, 1
          %s1258 = smul.addr %s1257, 12
          %s1259 = scalar_lea.vmem [#allocation11], %s1258
          %1260 = dma.done %s1256, 192
        $region76: #{tpu_custom_call.1} parent=67 // pred_fallthru
          _
        // Predicated region
        $region77: #{tpu_custom_call.1} parent=67 // pred_check
          %p1261 = pneg %p230
        $region78: #{tpu_custom_call.1} parent=67 // pred_check_branch
          %1263 = sbr.rel (%p1261) target = $region80
        $region79: #{tpu_custom_call.1} parent=67 // pred_region
          %s1264 = sand.u32 %s32, 1
          %s1265 = scalar_lea.sflag [#allocation12], %s1264
          %s1266 = sand.u32 %s215, 1
          %s1267 = smul.addr %s1266, 12
          %s1268 = scalar_lea.vmem [#allocation13], %s1267
          %1269 = dma.done %s1265, 192
        $region80: #{tpu_custom_call.1} parent=67 // pred_fallthru
          _
      $region68: #{tpu_custom_call.1} parent=5 // pred_fallthru
        _
    $region6: #{tpu_custom_call.1} parent=1 // loop_footer
      %s30 = sadd.s32 1, %s26
    $region7: #{tpu_custom_call.1} parent=1 // loop_footer_branch
      %25 = sbr.rel target = $region3
    $region8: #{tpu_custom_call.1} parent=1 // loop_exit
      _
    %1270 = vsyncpa [#allocation3], 1
    %s1271 = scalar_lea.sflag [#allocation3], 1
    %1272 = vsyncpa %s1271, 1
    %1273 = vsyncpa [#allocation6], 1
    %s1274 = scalar_lea.sflag [#allocation6], 1
    %1275 = vsyncpa %s1274, 1
    %1276 = vsyncpa [#allocation9], 1
    %1277 = vsyncpa [#allocation4], 1
    %s1278 = scalar_lea.sflag [#allocation4], 1
    %1279 = vsyncpa %s1278, 1
    %1280 = vsyncpa [#allocation12], 1
    %s1281 = scalar_lea.sflag [#allocation12], 1
    %1282 = vsyncpa %s1281, 1

</llo_original>
